<compile_context>
chip_gen: v5e
topology: v5e:2x2
jax: 0.10.0
libtpu: 0.0.40
codegen_flags: <defaults>
</compile_context>

<pallas_src>
import jax
import jax.numpy as jnp
from jax.experimental import pallas as pl
from jax.experimental.pallas import tpu as pltpu


# ----------------------------- Pallas kernel --------------------------------
def _rope_kernel(x_ref, cos_ref, sin_ref, o_ref):
    # x_ref, o_ref : (TILE_S, L) with L = n_h * h_d  (lane axis)
    # cos_ref      : (TILE_S, L) interleaved cos, tiled across heads
    # sin_ref      : (TILE_S, L) interleaved sin, tiled across heads,
    #                sign-baked: even lanes hold -sin, odd lanes hold +sin
    x = x_ref[...].astype(jnp.float32)
    L = x.shape[-1]
    lane = x.ndim - 1

    # Pair-swap tensor: rot[..., 2k] = x[..., 2k+1], rot[..., 2k+1] = x[..., 2k]
    # built from two non-negative XLU rolls + a parity select.  Wrapped values
    # at lane 0 / lane L-1 are never selected by the parity mask.
    x_up = pltpu.roll(x, shift=L - 1, axis=lane)   # x_up[j] = x[j+1]
    x_dn = pltpu.roll(x, shift=1, axis=lane)       # x_dn[j] = x[j-1]
    parity = jax.lax.broadcasted_iota(jnp.int32, x.shape, lane) % 2
    rot = jnp.where(parity == 0, x_up, x_dn)

    # Sign of sin is pre-baked into the table, so no negation is needed here:
    #   out[2k]   = x[2k]*cos   + x[2k+1]*(-sin)
    #   out[2k+1] = x[2k+1]*cos + x[2k]  *(+sin)
    out = x * cos_ref[...] + rot * sin_ref[...]
    o_ref[...] = out.astype(o_ref.dtype)


# ------------------------- Cache / table preparation -------------------------
def build_rope_cache(dim: int, max_seq_len: int = 4096, base: int = 10000):
    """cos/sin of shape [max_seq_len, dim//2] (matches the PyTorch cache)."""
    theta = 1.0 / (base ** (jnp.arange(0, dim, 2, dtype=jnp.float32)[: dim // 2] / dim))
    seq_idx = jnp.arange(max_seq_len, dtype=jnp.float32)
    idx_theta = jnp.einsum("i,j->ij", seq_idx, theta)          # [max_seq_len, dim//2]
    return jnp.cos(idx_theta), jnp.sin(idx_theta)


def prep_rope_tables(cos_half, sin_half, n_h: int):
    """One-time (init-time) prep: interleave, bake the minus sign into the even
    lanes of the sin table, and tile across heads -> [max_seq_len, n_h*h_d]."""
    cos_il = jnp.repeat(cos_half, 2, axis=-1).astype(jnp.float32)   # [S, h_d]
    sin_il = jnp.repeat(sin_half, 2, axis=-1).astype(jnp.float32)   # [S, h_d]
    h_d = cos_il.shape[-1]
    sign = jnp.where(jnp.arange(h_d) % 2 == 0, -1.0, 1.0).astype(jnp.float32)
    sin_signed = sin_il * sign
    cos_tab = jnp.tile(cos_il, (1, n_h))                            # [S, n_h*h_d]
    sin_tab = jnp.tile(sin_signed, (1, n_h))                        # [S, n_h*h_d]
    return cos_tab, sin_tab


# ------------------------------ Host wrapper ---------------------------------
def _pick_tile_s(s: int, n_lanes: int, x_itemsize: int) -> int:
    # Keep (x + out) blocks in x dtype plus cos/sin f32 blocks, double-buffered,
    # inside ~24 MiB so it fits every generation's scoped VMEM with headroom.
    per_row = n_lanes * (2 * x_itemsize + 2 * 4)
    budget = 24 * 1024 * 1024
    t = budget // (2 * per_row)
    t = min(int(t), 512, s)
    t = max(8, (t // 8) * 8)
    if t >= s:
        return s          # full seq fits in one block (always a legal block shape)
    return t              # multiple of 8; ragged last block is masked by Pallas


@jax.jit
def rope_pallas(x, cos_tab, sin_tab):
    """Apply RoPE.  x: [b, s, n_h, h_d]; cos_tab/sin_tab: [>=s, n_h*h_d]."""
    b, s, n_h, h_d = x.shape
    L = n_h * h_d
    assert cos_tab.shape[-1] == L and sin_tab.shape[-1] == L
    assert cos_tab.shape[0] >= s

    x2 = x.reshape(b, s, L)                 # free reshape: heads fold into lanes
    cos_s = cos_tab[:s]
    sin_s = sin_tab[:s]

    tile_s = _pick_tile_s(s, L, x.dtype.itemsize)
    grid = (pl.cdiv(s, tile_s), b)          # batch innermost: cos/sin reused, no re-DMA

    out2 = pl.pallas_call(
        _rope_kernel,
        out_shape=jax.ShapeDtypeStruct((b, s, L), x.dtype),
        grid_spec=pltpu.PrefetchScalarGridSpec(
            num_scalar_prefetch=0,
            grid=grid,
            in_specs=[
                pl.BlockSpec((None, tile_s, L), lambda si, bi: (bi, si, 0)),
                pl.BlockSpec((tile_s, L), lambda si, bi: (si, 0)),
                pl.BlockSpec((tile_s, L), lambda si, bi: (si, 0)),
            ],
            out_specs=pl.BlockSpec((None, tile_s, L), lambda si, bi: (bi, si, 0)),
        ),
        compiler_params=pltpu.CompilerParams(
            dimension_semantics=("parallel", "parallel"),
            vmem_limit_bytes=40 * 1024 * 1024,
        ),
    )(x2, cos_s, sin_s)

    return out2.reshape(b, s, n_h, h_d)


# Pure-JAX reference mirroring the PyTorch forward (input_pos=None path).
def rope_reference(x, cos_half, sin_half):
    b, s, n_h, h_d = x.shape
    xs = x.astype(jnp.float32).reshape(b, s, n_h, h_d // 2, 2)
    c = cos_half[:s].reshape(1, s, 1, h_d // 2)
    sn = sin_half[:s].reshape(1, s, 1, h_d // 2)
    out = jnp.stack(
        [xs[..., 0] * c - xs[..., 1] * sn,
         xs[..., 1] * c + xs[..., 0] * sn], axis=-1)
    return out.reshape(b, s, n_h, h_d).astype(x.dtype)


if __name__ == "__main__":
    # TODO(synk): packed-sequence `input_pos` gather path not implemented;
    #             this covers the default (positions = token index) path.
    b, s, n_h, h_d = 2, 8, 4, 32
    key = jax.random.PRNGKey(0)
    x = jax.random.normal(key, (b, s, n_h, h_d), dtype=jnp.float32)

    cos_half, sin_half = build_rope_cache(dim=h_d, max_seq_len=64, base=10000)
    cos_tab, sin_tab = prep_rope_tables(cos_half, sin_half, n_h=n_h)   # init-time prep

    out = jax.block_until_ready(rope_pallas(x, cos_tab, sin_tab))

    ref = rope_reference(x, cos_half, sin_half)
    assert out.shape == x.shape and out.dtype == x.dtype
    assert jnp.allclose(out, ref, atol=1e-5, rtol=1e-5), "mismatch vs reference"

    print("KERNEL_OK")
</pallas_src>

<mosaic_0001>
module attributes {stable_mosaic.version = 11 : i64} {
  func.func @_rope_kernel(%arg0: i32, %arg1: i32, %arg2: memref<1x8x128xf32, #tpu.memory_space<vmem>>, %arg3: memref<8x128xf32, #tpu.memory_space<vmem>>, %arg4: memref<8x128xf32, #tpu.memory_space<vmem>>, %arg5: memref<1x8x128xf32, #tpu.memory_space<vmem>>) attributes {dimension_semantics = [#tpu.dimension_semantics<parallel>, #tpu.dimension_semantics<parallel>], iteration_bounds = array<i64: 1, 2>, scalar_prefetch = 0 : i64, scratch_operands = 0 : i64, tpu.core_type = #tpu.core_type<tc>, window_params = [{transform_indices = @transform_0, window_bounds = array<i64: 1, 8, 128>}, {transform_indices = @transform_1, window_bounds = array<i64: 8, 128>}, {transform_indices = @transform_2, window_bounds = array<i64: 8, 128>}, {transform_indices = @transform_3, window_bounds = array<i64: 1, 8, 128>}]} {
    %c0 = arith.constant 0 : index
    %c0_0 = arith.constant 0 : index
    %c0_1 = arith.constant 0 : index
    %0 = vector.load %arg2[%c0, %c0_0, %c0_1] : memref<1x8x128xf32, #tpu.memory_space<vmem>>, vector<1x8x128xf32>
    %1 = vector.shape_cast %0 : vector<1x8x128xf32> to vector<8x128xf32>
    %c127_i32 = arith.constant 127 : i32
    %2 = tpu.dynamic_rotate %1 by %c127_i32 dim 1 : vector<8x128xf32>, i32 -> vector<8x128xf32>
    %c1_i32 = arith.constant 1 : i32
    %3 = tpu.dynamic_rotate %1 by %c1_i32 dim 1 : vector<8x128xf32>, i32 -> vector<8x128xf32>
    %4 = tpu.iota {dimensions = array<i32: 1>} : vector<8x128xi32>
    %c2_i32 = arith.constant 2 : i32
    %c0_i32 = arith.constant 0 : i32
    %5 = arith.cmpi eq, %c2_i32, %c0_i32 : i32
    %c1_i32_2 = arith.constant 1 : i32
    %6 = arith.select %5, %c1_i32_2, %c2_i32 : i32
    %7 = vector.broadcast %6 : i32 to vector<8x128xi32>
    %8 = arith.remsi %4, %7 : vector<8x128xi32>
    %c0_i32_3 = arith.constant 0 : i32
    %9 = vector.broadcast %c0_i32_3 : i32 to vector<8x128xi32>
    %10 = arith.cmpi ne, %8, %9 : vector<8x128xi32>
    %c0_i32_4 = arith.constant 0 : i32
    %11 = vector.broadcast %c0_i32_4 : i32 to vector<8x128xi32>
    %12 = arith.cmpi slt, %8, %11 : vector<8x128xi32>
    %c0_i32_5 = arith.constant 0 : i32
    %13 = arith.cmpi slt, %6, %c0_i32_5 : i32
    %14 = vector.broadcast %13 : i1 to vector<8x128xi1>
    %15 = vector.broadcast %14 : vector<8x128xi1> to vector<8x128xi1>
    %16 = arith.xori %12, %15 : vector<8x128xi1>
    %17 = arith.andi %16, %10 : vector<8x128xi1>
    %18 = vector.broadcast %6 : i32 to vector<8x128xi32>
    %19 = arith.addi %8, %18 : vector<8x128xi32>
    %20 = arith.select %17, %19, %8 : vector<8x128xi1>, vector<8x128xi32>
    %c0_i32_6 = arith.constant 0 : i32
    %21 = vector.broadcast %c0_i32_6 : i32 to vector<8x128xi32>
    %22 = arith.cmpi eq, %20, %21 : vector<8x128xi32>
    %23 = arith.select %22, %2, %3 : vector<8x128xi1>, vector<8x128xf32>
    %c0_7 = arith.constant 0 : index
    %c0_8 = arith.constant 0 : index
    %24 = vector.load %arg3[%c0_7, %c0_8] : memref<8x128xf32, #tpu.memory_space<vmem>>, vector<8x128xf32>
    %25 = arith.mulf %1, %24 : vector<8x128xf32>
    %c0_9 = arith.constant 0 : index
    %c0_10 = arith.constant 0 : index
    %26 = vector.load %arg4[%c0_9, %c0_10] : memref<8x128xf32, #tpu.memory_space<vmem>>, vector<8x128xf32>
    %27 = arith.mulf %23, %26 : vector<8x128xf32>
    %28 = arith.addf %25, %27 : vector<8x128xf32>
    %c0_11 = arith.constant 0 : index
    %c0_12 = arith.constant 0 : index
    %c0_13 = arith.constant 0 : index
    %29 = vector.load %arg5[%c0_11, %c0_12, %c0_13] : memref<1x8x128xf32, #tpu.memory_space<vmem>>, vector<1x8x128xf32>
    %30 = vector.shape_cast %29 : vector<1x8x128xf32> to vector<8x128xf32>
    %31 = vector.shape_cast %28 : vector<8x128xf32> to vector<1x8x128xf32>
    tpu.vector_store %arg5[%c0_11, %c0_12, %c0_13], %31 {strides = array<i32>} : memref<1x8x128xf32, #tpu.memory_space<vmem>>, vector<1x8x128xf32>,
    return
  }
  func.func @transform_0(%arg0: i32, %arg1: i32) -> (i32, i32, i32) {
    %c0_i32 = arith.constant 0 : i32
    %c0_i32_0 = arith.constant 0 : i32
    return %arg1, %arg0, %c0_i32 : i32, i32, i32
  }
  func.func @transform_1(%arg0: i32, %arg1: i32) -> (i32, i32) {
    %c0_i32 = arith.constant 0 : i32
    %c0_i32_0 = arith.constant 0 : i32
    return %arg0, %c0_i32 : i32, i32
  }
  func.func @transform_2(%arg0: i32, %arg1: i32) -> (i32, i32) {
    %c0_i32 = arith.constant 0 : i32
    %c0_i32_0 = arith.constant 0 : i32
    return %arg0, %c0_i32 : i32, i32
  }
  func.func @transform_3(%arg0: i32, %arg1: i32) -> (i32, i32, i32) {
    %c0_i32 = arith.constant 0 : i32
    %c0_i32_0 = arith.constant 0 : i32
    return %arg1, %arg0, %c0_i32 : i32, i32, i32
  }
}

</mosaic_0001>

<llo_original>
// kernel: rope_pallas.1
$region0: #{rope_pallas.1}
  #allocation0 [shape = 'u32[]', space=smem, size = 0x4, offset = 0x4, fixed_abs, tag = 'smem constant byte address 0x4 - core index']
  #allocation1 [shape = 'u32[72,128]{1,0:T(1,128)}', space=vmem, size = 0x9000, scoped, tag = 'internal scratch']
  %s0 = inlined_call_operand.vmem [shape: f32[2,8,128], index: 0, kind: input, shape index: {}]
  %s1 = inlined_call_operand.vmem [shape: f32[8,128], index: 1, kind: input, shape index: {}]
  %s2 = inlined_call_operand.vmem [shape: f32[8,128], index: 2, kind: input, shape index: {}]
  %s3 = inlined_call_operand.vmem [shape: f32[2,8,128], index: 3, kind: output, shape index: {}]
  %s4 = sld [smem:[#allocation0]]
  $region45: #{rope_pallas.1} parent=0
    _
  %s6 = ssub.s32 1, %s4
  %s7 = scalar_select 0, %s6, %s4
  loop: start=0, step=1, limit=4
  $region2: #{rope_pallas.1} parent=0 // loop_pre_header
    _
  $region3: #{rope_pallas.1} parent=0 // loop_header
    %s9 = sphi 0, %s13
    %p10 = scmp.ge.s32.totalorder %s9, 4
    %s16 = sphi 0, %s28
    %s17 = sphi 0, %s24
    %s18 = sphi 0, %s16
    %s19 = sphi 0, %s17
    %s20 = sphi 0, %s18
    %s21 = sphi 0, %s19
    %s33 = sphi 0, %s35
    %s36 = sphi 0, %s33
    %s37 = sphi 0, %s36
    %s53 = sphi 0, %s37
    %s59 = sphi 0, %s61
    %s62 = sphi 0, %s59
    %s63 = sphi 0, %s62
    %s79 = sphi 0, %s63
    %s85 = sphi 0, %s87
    %s88 = sphi 0, %s85
    %s89 = sphi 0, %s88
    %s105 = sphi 0, %s89
    %s113 = sphi 0, %s115
    %s116 = sphi 0, %s113
    %s117 = sphi 0, %s116
    %s133 = sphi 0, %s117
  $region4: #{rope_pallas.1} parent=0 // loop_header_branch
    %12 = sbr.rel (%p10) target = $region8
  $region5: #{rope_pallas.1} parent=0 // loop_body
    %s14 = ssub.s32 %s9, 1
    %s15 = ssub.s32 %s9, 2
    %s22 = sadd.s32 1, %s17
    %p23 = scmp.ge.s32.totalorder %s22, 2
    %s24 = scalar_select %p23, 0, %s22
    %s25 = sadd.s32 1, %s16
    %s26 = scalar_select %p23, %s25, %s16
    %p27 = scmp.ge.s32.totalorder %s26, 1
    %s28 = scalar_select %p27, 0, %s26
    %s29 = ssub.s32 %s17, %s24
    %s30 = ssub.s32 %s16, %s28
    %s31 = sor.u32 %s29, %s30
    %p32 = scmp.eq.s32.totalorder %s31, 0
    %s34 = sadd.s32 %s33, 1
    %s35 = scalar_select %p32, %s33, %s34
    %p38 = pneg %p32
    %p39 = scmp.eq.s32.totalorder %s9, 1
    %p40 = por %p38, %p39
    %p41 = scmp.ne.s32.totalorder %s33, %s36
    %p42 = scmp.eq.s32.totalorder %s9, 0
    %p43 = por %p41, %p42
    %p44 = scmp.ne.s32.totalorder %s33, %s36
    %p45 = scmp.eq.s32.totalorder %s14, 1
    %p46 = por %p44, %p45
    %p47 = scmp.ne.s32.totalorder %s36, %s37
    %p48 = scmp.eq.s32.totalorder %s14, 0
    %p49 = por %p47, %p48
    %p50 = scmp.ne.s32.totalorder %s36, %s37
    %p51 = scmp.eq.s32.totalorder %s15, 1
    %p52 = por %p50, %p51
    %p54 = scmp.ne.s32.totalorder %s37, %s53
    %p55 = scmp.eq.s32.totalorder %s15, 0
    %p56 = por %p54, %p55
    %s57 = ssub.s32 %s16, %s28
    %p58 = scmp.eq.s32.totalorder %s57, 0
    %s60 = sadd.s32 %s59, 1
    %s61 = scalar_select %p58, %s59, %s60
    %p64 = pneg %p58
    %p65 = scmp.eq.s32.totalorder %s9, 1
    %p66 = por %p64, %p65
    %p67 = scmp.ne.s32.totalorder %s59, %s62
    %p68 = scmp.eq.s32.totalorder %s9, 0
    %p69 = por %p67, %p68
    %p70 = scmp.ne.s32.totalorder %s59, %s62
    %p71 = scmp.eq.s32.totalorder %s14, 1
    %p72 = por %p70, %p71
    %p73 = scmp.ne.s32.totalorder %s62, %s63
    %p74 = scmp.eq.s32.totalorder %s14, 0
    %p75 = por %p73, %p74
    %p76 = scmp.ne.s32.totalorder %s62, %s63
    %p77 = scmp.eq.s32.totalorder %s15, 1
    %p78 = por %p76, %p77
    %p80 = scmp.ne.s32.totalorder %s63, %s79
    %p81 = scmp.eq.s32.totalorder %s15, 0
    %p82 = por %p80, %p81
    %s83 = ssub.s32 %s16, %s28
    %p84 = scmp.eq.s32.totalorder %s83, 0
    %s86 = sadd.s32 %s85, 1
    %s87 = scalar_select %p84, %s85, %s86
    %p90 = pneg %p84
    %p91 = scmp.eq.s32.totalorder %s9, 1
    %p92 = por %p90, %p91
    %p93 = scmp.ne.s32.totalorder %s85, %s88
    %p94 = scmp.eq.s32.totalorder %s9, 0
    %p95 = por %p93, %p94
    %p96 = scmp.ne.s32.totalorder %s85, %s88
    %p97 = scmp.eq.s32.totalorder %s14, 1
    %p98 = por %p96, %p97
    %p99 = scmp.ne.s32.totalorder %s88, %s89
    %p100 = scmp.eq.s32.totalorder %s14, 0
    %p101 = por %p99, %p100
    %p102 = scmp.ne.s32.totalorder %s88, %s89
    %p103 = scmp.eq.s32.totalorder %s15, 1
    %p104 = por %p102, %p103
    %p106 = scmp.ne.s32.totalorder %s89, %s105
    %p107 = scmp.eq.s32.totalorder %s15, 0
    %p108 = por %p106, %p107
    %s109 = ssub.s32 %s17, %s24
    %s110 = ssub.s32 %s16, %s28
    %s111 = sor.u32 %s109, %s110
    %p112 = scmp.eq.s32.totalorder %s111, 0
    %s114 = sadd.s32 %s113, 1
    %s115 = scalar_select %p112, %s113, %s114
    %p118 = pneg %p112
    %p119 = scmp.eq.s32.totalorder %s9, 1
    %p120 = por %p118, %p119
    %p121 = scmp.ne.s32.totalorder %s113, %s116
    %p122 = scmp.eq.s32.totalorder %s9, 0
    %p123 = por %p121, %p122
    %p124 = scmp.ne.s32.totalorder %s113, %s116
    %p125 = scmp.eq.s32.totalorder %s14, 1
    %p126 = por %p124, %p125
    %p127 = scmp.ne.s32.totalorder %s116, %s117
    %p128 = scmp.eq.s32.totalorder %s14, 0
    %p129 = por %p127, %p128
    %p130 = scmp.ne.s32.totalorder %s116, %s117
    %p131 = scmp.eq.s32.totalorder %s15, 1
    %p132 = por %p130, %p131
    %p134 = scmp.ne.s32.totalorder %s117, %s133
    %p135 = scmp.eq.s32.totalorder %s15, 0
    %p136 = por %p134, %p135
    %p137 = scmp.le.s32.totalorder 1, %s9
    %p138 = scmp.lt.s32.totalorder %s9, 3
    %p139 = pnand %p137, %p138
    %p140 = pneg %p139
    // Predicated region
    $region9: #{rope_pallas.1} parent=5 // pred_check
      _
    $region10: #{rope_pallas.1} parent=5 // pred_check_branch
      %142 = sbr.rel (%p139) target = $region12
    $region11: #{rope_pallas.1} parent=5 // pred_region
      %s143 = ssub.s32 %s9, 1
      // Predicated region
      $region13: #{rope_pallas.1} parent=11 // pred_check
        %p144 = pneg %p75
      $region14: #{rope_pallas.1} parent=11 // pred_check_branch
        %146 = sbr.rel (%p144) target = $region16
      $region15: #{rope_pallas.1} parent=11 // pred_region
        %p147 = scmp.lt.s32.totalorder %s18, 0
        %s148 = scalar_select %p147, %s18, 0
        %s149 = smul.addr %s148, 8
        %s150 = scalar_lea.vmem %s1, %s149
      $region16: #{rope_pallas.1} parent=11 // pred_fallthru
        _
      // Predicated region
      $region17: #{rope_pallas.1} parent=11 // pred_check
        %p151 = pneg %p101
      $region18: #{rope_pallas.1} parent=11 // pred_check_branch
        %153 = sbr.rel (%p151) target = $region20
      $region19: #{rope_pallas.1} parent=11 // pred_region
        %p154 = scmp.lt.s32.totalorder %s18, 0
        %s155 = scalar_select %p154, %s18, 0
        %s156 = smul.addr %s155, 8
        %s157 = scalar_lea.vmem %s2, %s156
      $region20: #{rope_pallas.1} parent=11 // pred_fallthru
        _
    $region12: #{rope_pallas.1} parent=5 // pred_fallthru
      _
    %p158 = scmp.lt.s32.totalorder %s9, 2
    // Predicated region
    $region21: #{rope_pallas.1} parent=5 // pred_check
      %p159 = pneg %p158
    $region22: #{rope_pallas.1} parent=5 // pred_check_branch
      %161 = sbr.rel (%p159) target = $region24
    $region23: #{rope_pallas.1} parent=5 // pred_region
      // Predicated region
      $region25: #{rope_pallas.1} parent=23 // pred_check
        %p162 = pneg %p43
      $region26: #{rope_pallas.1} parent=23 // pred_check_branch
        %164 = sbr.rel (%p162) target = $region28
      $region27: #{rope_pallas.1} parent=23 // pred_region
        %p165 = scmp.lt.s32.totalorder %s17, 1
        %s166 = scalar_select %p165, %s17, 1
        %p167 = scmp.lt.s32.totalorder %s16, 0
        %s168 = scalar_select %p167, %s16, 0
        %s169 = sadd.s32 %s168, %s166
        %s170 = smul.addr %s169, 8
        %s171 = scalar_lea.vmem %s0, %s170
      $region28: #{rope_pallas.1} parent=23 // pred_fallthru
        _
    $region24: #{rope_pallas.1} parent=5 // pred_fallthru
      _
    %p172 = scmp.le.s32.totalorder 1, %s9
    %p173 = scmp.lt.s32.totalorder %s9, 3
    %p174 = pnand %p172, %p173
    %p175 = pneg %p174
    // Predicated region
    $region29: #{rope_pallas.1} parent=5 // pred_check
      _
    $region30: #{rope_pallas.1} parent=5 // pred_check_branch
      %177 = sbr.rel (%p174) target = $region32
    $region31: #{rope_pallas.1} parent=5 // pred_region
      %s178 = ssub.s32 %s9, 1
      %p179 = scmp.lt.s32.totalorder %s19, 1
      %s180 = scalar_select %p179, %s19, 1
      %p181 = scmp.lt.s32.totalorder %s18, 0
      %s182 = scalar_select %p181, %s18, 0
      %s183 = sadd.s32 %s182, %s180
      %s184 = smul.addr %s183, 8
      %s185 = scalar_lea.vmem %s0, %s184
      %p186 = pneg %p49
      %p187 = pneg %p46
      %p188 = scmp.lt.s32.totalorder %s18, 0
      %s189 = scalar_select %p188, %s18, 0
      %s190 = smul.addr %s189, 8
      %s191 = scalar_lea.vmem %s1, %s190
      %p192 = pneg %p75
      %p193 = pneg %p72
      %p194 = scmp.lt.s32.totalorder %s18, 0
      %s195 = scalar_select %p194, %s18, 0
      %s196 = smul.addr %s195, 8
      %s197 = scalar_lea.vmem %s2, %s196
      %p198 = pneg %p101
      %p199 = pneg %p98
      %p200 = pneg %p129
      %p201 = pneg %p126
      %p202 = scmp.lt.s32.totalorder %s19, 1
      %s203 = scalar_select %p202, %s19, 1
      %p204 = scmp.lt.s32.totalorder %s18, 0
      %s205 = scalar_select %p204, %s18, 0
      %s206 = sadd.s32 %s205, %s203
      %s207 = smul.addr %s206, 8
      %s208 = scalar_lea.vmem %s3, %s207
      %p209 = scmp.lt.s32.totalorder %s19, 1
      %s210 = scalar_select %p209, %s19, 1
      %p211 = scmp.lt.s32.totalorder %s18, 0
      %s212 = scalar_select %p211, %s18, 0
      %s213 = sadd.s32 %s212, %s210
      %s214 = smul.addr %s213, 8
      %s215 = scalar_lea.vmem %s0, %s214
      %p216 = scmp.lt.s32.totalorder %s18, 0
      %s217 = scalar_select %p216, %s18, 0
      %s218 = smul.addr %s217, 8
      %s219 = scalar_lea.vmem %s1, %s218
      %p220 = scmp.lt.s32.totalorder %s18, 0
      %s221 = scalar_select %p220, %s18, 0
      %s222 = smul.addr %s221, 8
      %s223 = scalar_lea.vmem %s2, %s222
      %p224 = scmp.lt.s32.totalorder %s19, 1
      %s225 = scalar_select %p224, %s19, 1
      %p226 = scmp.lt.s32.totalorder %s18, 0
      %s227 = scalar_select %p226, %s18, 0
      %s228 = sadd.s32 %s227, %s225
      %s229 = smul.addr %s228, 8
      %s230 = scalar_lea.vmem %s3, %s229
      %v231 = vld [vmem:[%s215] sm:$0xff]
      %232 = vrot.lane.b32.xlu0 %v231, 127
      %v233 = vpop.permute.xlu0 %232
      %234 = vrot.lane.b32.xlu0 %v231, 1
      %v235 = vpop.permute.xlu0 %234
      %v236 = vlaneseq
      %v237 = vand.u32 %v236, 127
      %vm238 = vcmp.lt.s32.totalorder %v237, 0
      %v239 = vsub.s32 0, %v237
      %v240 = vsel %vm238, %v239, %v237
      %v241 = vshrl.u32 %v240, 1
      %v242 = vand.u32 %v240, 1
      %v243 = vsub.s32 0, %v242
      %v244 = vsel %vm238, %v243, %v242
      %vm245 = vcmp.ne.s32.totalorder %v244, 0
      %vm246 = vcmp.lt.s32.totalorder %v244, 0
      %vm247 = vmand %vm246, %vm245
      %v248 = vadd.s32 %v244, 2
      %v249 = vsel %vm247, %v248, %v244
      %vm250 = vcmp.eq.s32.totalorder %v249, 0
      %v251 = vsel %vm250, %v233, %v235
      %v252 = vld [vmem:[%s219] sm:$0xff]
      %v253 = vmul.f32 %v231, %v252
      %v254 = vld [vmem:[%s223] sm:$0xff]
      %v255 = vmul.f32 %v251, %v254
      %v256 = vadd.f32 %v253, %v255
      %257 = vst [vmem:[%s230] sm:$0xff] %v256
      %p258 = scmp.lt.s32.totalorder %s19, 1
      %s259 = scalar_select %p258, %s19, 1
      %p260 = scmp.lt.s32.totalorder %s18, 0
      %s261 = scalar_select %p260, %s18, 0
      %s262 = sadd.s32 %s261, %s259
      %s263 = smul.addr %s262, 8
      %s264 = scalar_lea.vmem %s3, %s263
      // Predicated region
      $region33: #{rope_pallas.1} parent=31 // pred_check
        %p265 = pneg %p126
      $region34: #{rope_pallas.1} parent=31 // pred_check_branch
        %267 = sbr.rel (%p265) target = $region36
      $region35: #{rope_pallas.1} parent=31 // pred_region
        _
      $region36: #{rope_pallas.1} parent=31 // pred_fallthru
        _
    $region32: #{rope_pallas.1} parent=5 // pred_fallthru
      _
    %p268 = scmp.le.s32.totalorder 2, %s9
    // Predicated region
    $region37: #{rope_pallas.1} parent=5 // pred_check
      %p269 = pneg %p268
    $region38: #{rope_pallas.1} parent=5 // pred_check_branch
      %271 = sbr.rel (%p269) target = $region40
    $region39: #{rope_pallas.1} parent=5 // pred_region
      %s272 = ssub.s32 %s9, 2
      // Predicated region
      $region41: #{rope_pallas.1} parent=39 // pred_check
        %p273 = pneg %p132
      $region42: #{rope_pallas.1} parent=39 // pred_check_branch
        %275 = sbr.rel (%p273) target = $region44
      $region43: #{rope_pallas.1} parent=39 // pred_region
        %p276 = scmp.lt.s32.totalorder %s21, 1
        %s277 = scalar_select %p276, %s21, 1
        %p278 = scmp.lt.s32.totalorder %s20, 0
        %s279 = scalar_select %p278, %s20, 0
        %s280 = sadd.s32 %s279, %s277
        %s281 = smul.addr %s280, 8
        %s282 = scalar_lea.vmem %s3, %s281
      $region44: #{rope_pallas.1} parent=39 // pred_fallthru
        _
    $region40: #{rope_pallas.1} parent=5 // pred_fallthru
      _
  $region6: #{rope_pallas.1} parent=0 // loop_footer
    %s13 = sadd.s32 1, %s9
  $region7: #{rope_pallas.1} parent=0 // loop_footer_branch
    %8 = sbr.rel target = $region3
  $region8: #{rope_pallas.1} parent=0 // loop_exit
    _

</llo_original>
